<compile_context>
chip_gen: v5e
topology: v5e:2x2
jax: 0.10.0
libtpu: 0.0.40
codegen_flags: <defaults>
</compile_context>

<pallas_src>
import functools

import jax
import jax.numpy as jnp
from jax.experimental import pallas as pl
from jax.experimental.pallas import tpu as pltpu

LANE = 128      # lane width: hidden feature dims are padded to this
SUBLANE = 8     # f32 sublane height


def _round_up(n, m):
    return ((n + m - 1) // m) * m


def _autoencoder_kernel(x_ref,
                        w1_ref, b1_ref,
                        w23_ref, b23_ref,
                        w4_ref, b4_ref,
                        o_ref):
    # x arrives as the original (bt, input_dim) f32 rows straight from HBM;
    # the bf16 cast for the MXU happens here in VMEM (VPU has huge slack in a
    # mem-bound kernel).
    x = x_ref[...].astype(jnp.bfloat16)

    # encoder Linear(input_dim, 64) + ReLU   (hidden dim padded to 128 lanes)
    h1 = jnp.dot(x, w1_ref[...], preferred_element_type=jnp.float32) + b1_ref[...]
    h1 = jnp.maximum(h1, 0.0)

    # encoder Linear(64, latent) and decoder Linear(latent, 64) have no
    # nonlinearity between them, so they were folded offline into one 64x64
    # (padded 128x128) weight:  h2 = relu(h1 @ (w2 @ w3) + (b2 @ w3 + b3)).
    h2 = jnp.dot(h1.astype(jnp.bfloat16), w23_ref[...],
                 preferred_element_type=jnp.float32) + b23_ref[...]
    h2 = jnp.maximum(h2, 0.0)

    # decoder Linear(64, input_dim): output dim left unpadded so the result
    # lands directly in the (bt, input_dim) f32 output block (no padded
    # columns, no post-kernel slice pass).
    recon = jnp.dot(h2.astype(jnp.bfloat16), w4_ref[...],
                    preferred_element_type=jnp.float32) + b4_ref[...]

    o_ref[...] = recon.astype(o_ref.dtype)


def prepare_params(params):
    """Fold the two middle linears and lay the weights out for the kernel.

    * w2 @ w3 fused in f32 into a single 64x64 weight + bias (exact: there is
      no nonlinearity between those layers) -> one fewer matmul per row.
    * Hidden feature dims zero-padded to 128 lanes (exact: padded rows / cols /
      bias lanes are 0 and ReLU(0) == 0, so padded lanes stay 0 end-to-end).
    * The network input dim (w1 rows) and output dim (w4 cols, b4) are left
      unpadded so x and the reconstruction move over HBM at their true size.
    * Matmul operands bf16 (f32 accumulation); biases stay f32.
    """
    w1, b1 = params["w1"], params["b1"]
    w2, b2 = params["w2"], params["b2"]
    w3, b3 = params["w3"], params["b3"]
    w4, b4 = params["w4"], params["b4"]

    d_in, hidden = w1.shape
    d_out = w4.shape[1]
    hp = _round_up(hidden, LANE)

    w23 = w2.astype(jnp.float32) @ w3.astype(jnp.float32)                  # (64, 64)
    b23 = (b2.astype(jnp.float32).reshape(1, -1) @ w3.astype(jnp.float32)
           + b3.astype(jnp.float32).reshape(1, -1))                        # (1, 64)

    def pad_w(w, rows, cols):
        out = jnp.zeros((rows, cols), jnp.bfloat16)
        return out.at[: w.shape[0], : w.shape[1]].set(w.astype(jnp.bfloat16))

    def pad_b(b, cols):
        out = jnp.zeros((1, cols), jnp.float32)
        return out.at[:, : b.shape[-1]].set(b.astype(jnp.float32).reshape(1, -1))

    return {
        "w1": pad_w(w1, d_in, hp),                       # (D,  Hp)  bf16
        "b1": pad_b(b1, hp),                             # (1,  Hp)  f32
        "w23": pad_w(w23, hp, hp),                       # (Hp, Hp)  bf16
        "b23": pad_b(b23, hp),                           # (1,  Hp)  f32
        "w4": pad_w(w4, hp, d_out),                      # (Hp, D)   bf16 (out dim unpadded)
        "b4": b4.astype(jnp.float32).reshape(1, -1),     # (1,  D)   f32
    }


@functools.partial(jax.jit, static_argnames=("batch_tile",))
def autoencoder_forward(x, prepared_params, *, batch_tile=1024):
    """x: (B, input_dim) float32 -> reconstruction (B, input_dim) float32."""
    B, D = x.shape
    p = prepared_params
    assert p["w1"].shape[0] == D, "params were prepared for a different input_dim"

    # Batch tile:
    #  * large (default 1024 rows) to fill the MXU and amortize the ~0.35us
    #    per-grid-step overhead,
    #  * capped near ceil(B/2) (sublane-rounded) so there are >= 2 grid steps
    #    whenever possible -> the "parallel" batch axis can be split across
    #    the two TensorCores on v7x,
    #  * the batch is NOT padded: grid = cdiv(B, bt); the ragged last block is
    #    handled by masked writes (rows are independent, so over-hanging rows
    #    cannot contaminate valid output).
    bt = min(batch_tile, _round_up(max((B + 1) // 2, 1), SUBLANE))
    if bt >= B:          # single block anyway -> use the exact batch size
        bt = B
    grid = pl.cdiv(B, bt)

    def bcast_spec(shape):
        # Whole array as one block, identical at every grid step (resident).
        return pl.BlockSpec(shape, lambda i: (0,) * len(shape))

    return pl.pallas_call(
        _autoencoder_kernel,
        out_shape=jax.ShapeDtypeStruct((B, D), jnp.float32),
        grid_spec=pltpu.PrefetchScalarGridSpec(
            num_scalar_prefetch=0,
            grid=(grid,),
            in_specs=[
                pl.BlockSpec((bt, D), lambda i: (i, 0)),        # x rows, unpadded f32
                bcast_spec(p["w1"].shape), bcast_spec(p["b1"].shape),
                bcast_spec(p["w23"].shape), bcast_spec(p["b23"].shape),
                bcast_spec(p["w4"].shape), bcast_spec(p["b4"].shape),
            ],
            out_specs=pl.BlockSpec((bt, D), lambda i: (i, 0)),  # recon rows, unpadded f32
        ),
        compiler_params=pltpu.CompilerParams(
            dimension_semantics=("parallel",)),
    )(x, p["w1"], p["b1"], p["w23"], p["b23"], p["w4"], p["b4"])


def init_params(key, input_dim, latent_dim=16, hidden=64):
    """Deterministic init mimicking nn.Linear's U(-1/sqrt(fan_in), 1/sqrt(fan_in)).
    Weights stored transposed, i.e. (in_features, out_features)."""
    def linear(k, fan_in, fan_out):
        kw, kb = jax.random.split(k)
        bound = 1.0 / jnp.sqrt(fan_in)
        w = jax.random.uniform(kw, (fan_in, fan_out), jnp.float32, -bound, bound)
        b = jax.random.uniform(kb, (1, fan_out), jnp.float32, -bound, bound)
        return w, b

    k1, k2, k3, k4 = jax.random.split(key, 4)
    w1, b1 = linear(k1, input_dim, hidden)      # encoder Linear(input_dim, 64)
    w2, b2 = linear(k2, hidden, latent_dim)     # encoder Linear(64, latent_dim)
    w3, b3 = linear(k3, latent_dim, hidden)     # decoder Linear(latent_dim, 64)
    w4, b4 = linear(k4, hidden, input_dim)      # decoder Linear(64, input_dim)
    return {"w1": w1, "b1": b1, "w2": w2, "b2": b2,
            "w3": w3, "b3": b3, "w4": w4, "b4": b4}


def reference_forward(x, p):
    """Pure-JAX f32 reference with the original (unfused, unpadded) parameters."""
    h1 = jnp.maximum(x @ p["w1"] + p["b1"], 0.0)
    z = h1 @ p["w2"] + p["b2"]
    h2 = jnp.maximum(z @ p["w3"] + p["b3"], 0.0)
    return h2 @ p["w4"] + p["b4"]


if __name__ == "__main__":
    key = jax.random.PRNGKey(0)
    k_param, k_x = jax.random.split(key)

    batch, input_dim, latent_dim = 16, 32, 16
    params = init_params(k_param, input_dim, latent_dim)
    prepared = prepare_params(params)
    x = jax.random.normal(k_x, (batch, input_dim), jnp.float32)

    out = autoencoder_forward(x, prepared)
    out = jax.block_until_ready(out)

    ref = reference_forward(x, params)
    assert out.shape == (batch, input_dim)
    # bf16 matmul operands (f32 accumulation) -> looser tolerance than pure-f32.
    max_err = float(jnp.max(jnp.abs(out - ref)))
    assert jnp.allclose(out, ref, atol=3e-2, rtol=3e-2), f"max abs err {max_err}"

    print("KERNEL_OK")
</pallas_src>

<mosaic_0001>
module attributes {stable_mosaic.version = 11 : i64} {
  func.func @_autoencoder_kernel(%arg0: i32, %arg1: memref<8x32xf32, #tpu.memory_space<vmem>>, %arg2: memref<32x128xbf16, #tpu.memory_space<vmem>>, %arg3: memref<1x128xf32, #tpu.memory_space<vmem>>, %arg4: memref<128x128xbf16, #tpu.memory_space<vmem>>, %arg5: memref<1x128xf32, #tpu.memory_space<vmem>>, %arg6: memref<128x32xbf16, #tpu.memory_space<vmem>>, %arg7: memref<1x32xf32, #tpu.memory_space<vmem>>, %arg8: memref<8x32xf32, #tpu.memory_space<vmem>>) attributes {dimension_semantics = [#tpu.dimension_semantics<parallel>], iteration_bounds = array<i64: 2>, scalar_prefetch = 0 : i64, scratch_operands = 0 : i64, tpu.core_type = #tpu.core_type<tc>, window_params = [{transform_indices = @transform_0, window_bounds = array<i64: 8, 32>}, {pipeline_mode = #tpu.pipeline_mode<synchronous>, transform_indices = @transform_1, window_bounds = array<i64: 32, 128>}, {pipeline_mode = #tpu.pipeline_mode<synchronous>, transform_indices = @transform_2, window_bounds = array<i64: 1, 128>}, {pipeline_mode = #tpu.pipeline_mode<synchronous>, transform_indices = @transform_3, window_bounds = array<i64: 128, 128>}, {pipeline_mode = #tpu.pipeline_mode<synchronous>, transform_indices = @transform_4, window_bounds = array<i64: 1, 128>}, {pipeline_mode = #tpu.pipeline_mode<synchronous>, transform_indices = @transform_5, window_bounds = array<i64: 128, 32>}, {pipeline_mode = #tpu.pipeline_mode<synchronous>, transform_indices = @transform_6, window_bounds = array<i64: 1, 32>}, {transform_indices = @transform_7, window_bounds = array<i64: 8, 32>}]} {
    %c0 = arith.constant 0 : index
    %c0_0 = arith.constant 0 : index
    %0 = vector.load %arg1[%c0, %c0_0] : memref<8x32xf32, #tpu.memory_space<vmem>>, vector<8x32xf32>
    %1 = arith.truncf %0 : vector<8x32xf32> to vector<8x32xbf16>
    %c0_1 = arith.constant 0 : index
    %c0_2 = arith.constant 0 : index
    %2 = vector.load %arg2[%c0_1, %c0_2] : memref<32x128xbf16, #tpu.memory_space<vmem>>, vector<32x128xbf16>
    %cst = arith.constant dense<0.000000e+00> : vector<8x128xf32>
    %3 = tpu.matmul %1, %2, %cst {dimension_numbers = #tpu.dot_dimension_numbers<[1], [0], [0], [1], [0, 0, 1, 1], [], []>} : vector<8x32xbf16>, vector<32x128xbf16>, vector<8x128xf32> -> vector<8x128xf32>
    %c0_3 = arith.constant 0 : index
    %c0_4 = arith.constant 0 : index
    %4 = vector.load %arg3[%c0_3, %c0_4] : memref<1x128xf32, #tpu.memory_space<vmem>>, vector<1x128xf32>
    %5 = vector.broadcast %4 : vector<1x128xf32> to vector<8x128xf32>
    %6 = arith.addf %3, %5 : vector<8x128xf32>
    %cst_5 = arith.constant 0.000000e+00 : f32
    %7 = vector.broadcast %cst_5 : f32 to vector<8x128xf32>
    %8 = arith.maximumf %6, %7 : vector<8x128xf32>
    %9 = arith.truncf %8 : vector<8x128xf32> to vector<8x128xbf16>
    %c0_6 = arith.constant 0 : index
    %c0_7 = arith.constant 0 : index
    %10 = vector.load %arg4[%c0_6, %c0_7] : memref<128x128xbf16, #tpu.memory_space<vmem>>, vector<128x128xbf16>
    %cst_8 = arith.constant dense<0.000000e+00> : vector<8x128xf32>
    %11 = tpu.matmul %9, %10, %cst_8 {dimension_numbers = #tpu.dot_dimension_numbers<[1], [0], [0], [1], [0, 0, 1, 1], [], []>} : vector<8x128xbf16>, vector<128x128xbf16>, vector<8x128xf32> -> vector<8x128xf32>
    %c0_9 = arith.constant 0 : index
    %c0_10 = arith.constant 0 : index
    %12 = vector.load %arg5[%c0_9, %c0_10] : memref<1x128xf32, #tpu.memory_space<vmem>>, vector<1x128xf32>
    %13 = vector.broadcast %12 : vector<1x128xf32> to vector<8x128xf32>
    %14 = arith.addf %11, %13 : vector<8x128xf32>
    %cst_11 = arith.constant 0.000000e+00 : f32
    %15 = vector.broadcast %cst_11 : f32 to vector<8x128xf32>
    %16 = arith.maximumf %14, %15 : vector<8x128xf32>
    %17 = arith.truncf %16 : vector<8x128xf32> to vector<8x128xbf16>
    %c0_12 = arith.constant 0 : index
    %c0_13 = arith.constant 0 : index
    %18 = vector.load %arg6[%c0_12, %c0_13] : memref<128x32xbf16, #tpu.memory_space<vmem>>, vector<128x32xbf16>
    %cst_14 = arith.constant dense<0.000000e+00> : vector<8x32xf32>
    %19 = tpu.matmul %17, %18, %cst_14 {dimension_numbers = #tpu.dot_dimension_numbers<[1], [0], [0], [1], [0, 0, 1, 1], [], []>} : vector<8x128xbf16>, vector<128x32xbf16>, vector<8x32xf32> -> vector<8x32xf32>
    %c0_15 = arith.constant 0 : index
    %c0_16 = arith.constant 0 : index
    %20 = vector.load %arg7[%c0_15, %c0_16] : memref<1x32xf32, #tpu.memory_space<vmem>>, vector<1x32xf32>
    %21 = vector.broadcast %20 : vector<1x32xf32> to vector<8x32xf32>
    %22 = arith.addf %19, %21 : vector<8x32xf32>
    %c0_17 = arith.constant 0 : index
    %c0_18 = arith.constant 0 : index
    %23 = vector.load %arg8[%c0_17, %c0_18] : memref<8x32xf32, #tpu.memory_space<vmem>>, vector<8x32xf32>
    tpu.vector_store %arg8[%c0_17, %c0_18], %22 {strides = array<i32>} : memref<8x32xf32, #tpu.memory_space<vmem>>, vector<8x32xf32>,
    return
  }
  func.func @transform_0(%arg0: i32) -> (i32, i32) {
    %c0_i32 = arith.constant 0 : i32
    %c0_i32_0 = arith.constant 0 : i32
    return %arg0, %c0_i32 : i32, i32
  }
  func.func @transform_1(%arg0: i32) -> (i32, i32) {
    %c0_i32 = arith.constant 0 : i32
    %c0_i32_0 = arith.constant 0 : i32
    %c0_i32_1 = arith.constant 0 : i32
    return %c0_i32, %c0_i32_0 : i32, i32
  }
  func.func @transform_2(%arg0: i32) -> (i32, i32) {
    %c0_i32 = arith.constant 0 : i32
    %c0_i32_0 = arith.constant 0 : i32
    %c0_i32_1 = arith.constant 0 : i32
    return %c0_i32, %c0_i32_0 : i32, i32
  }
  func.func @transform_3(%arg0: i32) -> (i32, i32) {
    %c0_i32 = arith.constant 0 : i32
    %c0_i32_0 = arith.constant 0 : i32
    %c0_i32_1 = arith.constant 0 : i32
    return %c0_i32, %c0_i32_0 : i32, i32
  }
  func.func @transform_4(%arg0: i32) -> (i32, i32) {
    %c0_i32 = arith.constant 0 : i32
    %c0_i32_0 = arith.constant 0 : i32
    %c0_i32_1 = arith.constant 0 : i32
    return %c0_i32, %c0_i32_0 : i32, i32
  }
  func.func @transform_5(%arg0: i32) -> (i32, i32) {
    %c0_i32 = arith.constant 0 : i32
    %c0_i32_0 = arith.constant 0 : i32
    %c0_i32_1 = arith.constant 0 : i32
    return %c0_i32, %c0_i32_0 : i32, i32
  }
  func.func @transform_6(%arg0: i32) -> (i32, i32) {
    %c0_i32 = arith.constant 0 : i32
    %c0_i32_0 = arith.constant 0 : i32
    %c0_i32_1 = arith.constant 0 : i32
    return %c0_i32, %c0_i32_0 : i32, i32
  }
  func.func @transform_7(%arg0: i32) -> (i32, i32) {
    %c0_i32 = arith.constant 0 : i32
    %c0_i32_0 = arith.constant 0 : i32
    return %arg0, %c0_i32 : i32, i32
  }
}

</mosaic_0001>

<llo_original>
// kernel: autoencoder_forward.1
$region0: #{autoencoder_forward.1}
  #allocation0 [shape = 'u32[]', space=smem, size = 0x4, offset = 0x4, fixed_abs, tag = 'smem constant byte address 0x4 - core index']
  #allocation1 [shape = 'u32[72,128]{1,0:T(1,128)}', space=vmem, size = 0x9000, scoped, tag = 'internal scratch']
  %s0 = inlined_call_operand.vmem [shape: f32[16,32], index: 0, kind: input, shape index: {}]
  %s1 = inlined_call_operand.hbm [shape: bf16[32,128], index: 1, kind: input, shape index: {}]
  %s2 = inlined_call_operand.vmem [shape: f32[1,128], index: 2, kind: input, shape index: {}]
  %s3 = inlined_call_operand.vmem [shape: bf16[128,128], index: 3, kind: input, shape index: {}]
  %s4 = inlined_call_operand.vmem [shape: f32[1,128], index: 4, kind: input, shape index: {}]
  %s5 = inlined_call_operand.vmem [shape: bf16[128,32], index: 5, kind: input, shape index: {}]
  %s6 = inlined_call_operand.vmem [shape: f32[1,32], index: 6, kind: input, shape index: {}]
  %s7 = inlined_call_operand.hbm [shape: f32[16,32], index: 7, kind: output, shape index: {}]
  %s8 = sld [smem:[#allocation0]]
  $region65: #{autoencoder_forward.1} parent=0
    _
  %s10 = ssub.s32 1, %s8
  %s11 = scalar_select 0, %s10, %s8
  $region1: #{autoencoder_forward.1} parent=0
    #allocation2 [shape = 'u8[8192]{0}', space=vmem, size = 0x2000, scoped, tag = 'input window, operand 1, single buffered']
    #allocation3 [shape = 's32[2]{0}', space=sflag, size = 0x8, scoped, tag = 'scoped memory for autoencoder_forward.1']
    #allocation4 [shape = 's32[2]{0}', space=sflag, size = 0x8, scoped, tag = 'scoped memory for autoencoder_forward.1']
    #allocation5 [shape = 'u8[8192]{0}', space=vmem, size = 0x2000, scoped, tag = 'output window, operand 0']
    %12 = vsyncpa [#allocation3], 0
    %13 = vsyncpa [#allocation4], 0
    %s14 = scalar_lea.sflag [#allocation4], 1
    %15 = vsyncpa %s14, 0
    loop: start=0, step=1, limit=4
    $region2: #{autoencoder_forward.1} parent=1 // loop_pre_header
      _
    $region3: #{autoencoder_forward.1} parent=1 // loop_header
      %s17 = sphi 0, %s21
      %p18 = scmp.ge.s32.totalorder %s17, 4
      %s27 = sphi 0, %s29
      %s30 = sphi 0, %s27
      %s31 = sphi 0, %s30
      %s47 = sphi 0, %s31
      %s51 = sphi 0, %s51
      %s53 = sphi 0, %s51
      %s54 = sphi 0, %s53
      %s68 = sphi 0, %s54
      %s72 = sphi 0, %s72
      %s74 = sphi 0, %s72
      %s75 = sphi 0, %s74
      %s89 = sphi 0, %s75
      %s93 = sphi 0, %s93
      %s95 = sphi 0, %s93
      %s96 = sphi 0, %s95
      %s110 = sphi 0, %s96
      %s114 = sphi 0, %s114
      %s116 = sphi 0, %s114
      %s117 = sphi 0, %s116
      %s131 = sphi 0, %s117
      %s135 = sphi 0, %s135
      %s137 = sphi 0, %s135
      %s138 = sphi 0, %s137
      %s152 = sphi 0, %s138
      %s156 = sphi 0, %s156
      %s158 = sphi 0, %s156
      %s159 = sphi 0, %s158
      %s173 = sphi 0, %s159
      %s179 = sphi 0, %s181
      %s182 = sphi 0, %s179
      %s183 = sphi 0, %s182
      %s199 = sphi 0, %s183
    $region4: #{autoencoder_forward.1} parent=1 // loop_header_branch
      %20 = sbr.rel (%p18) target = $region8
    $region5: #{autoencoder_forward.1} parent=1 // loop_body
      %s22 = ssub.s32 %s17, 1
      %s23 = ssub.s32 %s17, 2
      %s24 = sadd.s32 %s17, 1
      %s25 = ssub.s32 %s17, %s24
      %p26 = scmp.eq.s32.totalorder %s25, 0
      %s28 = sadd.s32 %s27, 1
      %s29 = scalar_select %p26, %s27, %s28
      %p32 = pneg %p26
      %p33 = scmp.eq.s32.totalorder %s17, 1
      %p34 = por %p32, %p33
      %p35 = scmp.ne.s32.totalorder %s27, %s30
      %p36 = scmp.eq.s32.totalorder %s17, 0
      %p37 = por %p35, %p36
      %p38 = scmp.ne.s32.totalorder %s27, %s30
      %p39 = scmp.eq.s32.totalorder %s22, 1
      %p40 = por %p38, %p39
      %p41 = scmp.ne.s32.totalorder %s30, %s31
      %p42 = scmp.eq.s32.totalorder %s22, 0
      %p43 = por %p41, %p42
      %p44 = scmp.ne.s32.totalorder %s30, %s31
      %p45 = scmp.eq.s32.totalorder %s23, 1
      %p46 = por %p44, %p45
      %p48 = scmp.ne.s32.totalorder %s31, %s47
      %p49 = scmp.eq.s32.totalorder %s23, 0
      %p50 = por %p48, %p49
      %s52 = sadd.s32 %s51, 1
      %p55 = scmp.eq.s32.totalorder %s17, 1
      %p56 = scmp.ne.s32.totalorder %s51, %s53
      %p57 = scmp.eq.s32.totalorder %s17, 0
      %p58 = por %p56, %p57
      %p59 = scmp.ne.s32.totalorder %s51, %s53
      %p60 = scmp.eq.s32.totalorder %s22, 1
      %p61 = por %p59, %p60
      %p62 = scmp.ne.s32.totalorder %s53, %s54
      %p63 = scmp.eq.s32.totalorder %s22, 0
      %p64 = por %p62, %p63
      %p65 = scmp.ne.s32.totalorder %s53, %s54
      %p66 = scmp.eq.s32.totalorder %s23, 1
      %p67 = por %p65, %p66
      %p69 = scmp.ne.s32.totalorder %s54, %s68
      %p70 = scmp.eq.s32.totalorder %s23, 0
      %p71 = por %p69, %p70
      %s73 = sadd.s32 %s72, 1
      %p76 = scmp.eq.s32.totalorder %s17, 1
      %p77 = scmp.ne.s32.totalorder %s72, %s74
      %p78 = scmp.eq.s32.totalorder %s17, 0
      %p79 = por %p77, %p78
      %p80 = scmp.ne.s32.totalorder %s72, %s74
      %p81 = scmp.eq.s32.totalorder %s22, 1
      %p82 = por %p80, %p81
      %p83 = scmp.ne.s32.totalorder %s74, %s75
      %p84 = scmp.eq.s32.totalorder %s22, 0
      %p85 = por %p83, %p84
      %p86 = scmp.ne.s32.totalorder %s74, %s75
      %p87 = scmp.eq.s32.totalorder %s23, 1
      %p88 = por %p86, %p87
      %p90 = scmp.ne.s32.totalorder %s75, %s89
      %p91 = scmp.eq.s32.totalorder %s23, 0
      %p92 = por %p90, %p91
      %s94 = sadd.s32 %s93, 1
      %p97 = scmp.eq.s32.totalorder %s17, 1
      %p98 = scmp.ne.s32.totalorder %s93, %s95
      %p99 = scmp.eq.s32.totalorder %s17, 0
      %p100 = por %p98, %p99
      %p101 = scmp.ne.s32.totalorder %s93, %s95
      %p102 = scmp.eq.s32.totalorder %s22, 1
      %p103 = por %p101, %p102
      %p104 = scmp.ne.s32.totalorder %s95, %s96
      %p105 = scmp.eq.s32.totalorder %s22, 0
      %p106 = por %p104, %p105
      %p107 = scmp.ne.s32.totalorder %s95, %s96
      %p108 = scmp.eq.s32.totalorder %s23, 1
      %p109 = por %p107, %p108
      %p111 = scmp.ne.s32.totalorder %s96, %s110
      %p112 = scmp.eq.s32.totalorder %s23, 0
      %p113 = por %p111, %p112
      %s115 = sadd.s32 %s114, 1
      %p118 = scmp.eq.s32.totalorder %s17, 1
      %p119 = scmp.ne.s32.totalorder %s114, %s116
      %p120 = scmp.eq.s32.totalorder %s17, 0
      %p121 = por %p119, %p120
      %p122 = scmp.ne.s32.totalorder %s114, %s116
      %p123 = scmp.eq.s32.totalorder %s22, 1
      %p124 = por %p122, %p123
      %p125 = scmp.ne.s32.totalorder %s116, %s117
      %p126 = scmp.eq.s32.totalorder %s22, 0
      %p127 = por %p125, %p126
      %p128 = scmp.ne.s32.totalorder %s116, %s117
      %p129 = scmp.eq.s32.totalorder %s23, 1
      %p130 = por %p128, %p129
      %p132 = scmp.ne.s32.totalorder %s117, %s131
      %p133 = scmp.eq.s32.totalorder %s23, 0
      %p134 = por %p132, %p133
      %s136 = sadd.s32 %s135, 1
      %p139 = scmp.eq.s32.totalorder %s17, 1
      %p140 = scmp.ne.s32.totalorder %s135, %s137
      %p141 = scmp.eq.s32.totalorder %s17, 0
      %p142 = por %p140, %p141
      %p143 = scmp.ne.s32.totalorder %s135, %s137
      %p144 = scmp.eq.s32.totalorder %s22, 1
      %p145 = por %p143, %p144
      %p146 = scmp.ne.s32.totalorder %s137, %s138
      %p147 = scmp.eq.s32.totalorder %s22, 0
      %p148 = por %p146, %p147
      %p149 = scmp.ne.s32.totalorder %s137, %s138
      %p150 = scmp.eq.s32.totalorder %s23, 1
      %p151 = por %p149, %p150
      %p153 = scmp.ne.s32.totalorder %s138, %s152
      %p154 = scmp.eq.s32.totalorder %s23, 0
      %p155 = por %p153, %p154
      %s157 = sadd.s32 %s156, 1
      %p160 = scmp.eq.s32.totalorder %s17, 1
      %p161 = scmp.ne.s32.totalorder %s156, %s158
      %p162 = scmp.eq.s32.totalorder %s17, 0
      %p163 = por %p161, %p162
      %p164 = scmp.ne.s32.totalorder %s156, %s158
      %p165 = scmp.eq.s32.totalorder %s22, 1
      %p166 = por %p164, %p165
      %p167 = scmp.ne.s32.totalorder %s158, %s159
      %p168 = scmp.eq.s32.totalorder %s22, 0
      %p169 = por %p167, %p168
      %p170 = scmp.ne.s32.totalorder %s158, %s159
      %p171 = scmp.eq.s32.totalorder %s23, 1
      %p172 = por %p170, %p171
      %p174 = scmp.ne.s32.totalorder %s159, %s173
      %p175 = scmp.eq.s32.totalorder %s23, 0
      %p176 = por %p174, %p175
      %s177 = ssub.s32 %s17, %s24
      %p178 = scmp.eq.s32.totalorder %s177, 0
      %s180 = sadd.s32 %s179, 1
      %s181 = scalar_select %p178, %s179, %s180
      %p184 = pneg %p178
      %p185 = scmp.eq.s32.totalorder %s17, 1
      %p186 = por %p184, %p185
      %p187 = scmp.ne.s32.totalorder %s179, %s182
      %p188 = scmp.eq.s32.totalorder %s17, 0
      %p189 = por %p187, %p188
      %p190 = scmp.ne.s32.totalorder %s179, %s182
      %p191 = scmp.eq.s32.totalorder %s22, 1
      %p192 = por %p190, %p191
      %p193 = scmp.ne.s32.totalorder %s182, %s183
      %p194 = scmp.eq.s32.totalorder %s22, 0
      %p195 = por %p193, %p194
      %p196 = scmp.ne.s32.totalorder %s182, %s183
      %p197 = scmp.eq.s32.totalorder %s23, 1
      %p198 = por %p196, %p197
      %p200 = scmp.ne.s32.totalorder %s183, %s199
      %p201 = scmp.eq.s32.totalorder %s23, 0
      %p202 = por %p200, %p201
      %p203 = scmp.le.s32.totalorder 1, %s17
      %p204 = scmp.lt.s32.totalorder %s17, 3
      %p205 = pnand %p203, %p204
      %p206 = pneg %p205
      // Predicated region
      $region9: #{autoencoder_forward.1} parent=5 // pred_check
        _
      $region10: #{autoencoder_forward.1} parent=5 // pred_check_branch
        %208 = sbr.rel (%p205) target = $region12
      $region11: #{autoencoder_forward.1} parent=5 // pred_region
        %s209 = ssub.s32 %s17, 1
        // Predicated region
        $region13: #{autoencoder_forward.1} parent=11 // pred_check
          %p210 = pneg %p64
        $region14: #{autoencoder_forward.1} parent=11 // pred_check_branch
          %212 = sbr.rel (%p210) target = $region16
        $region15: #{autoencoder_forward.1} parent=11 // pred_region
          %214 = vsyncadd [#allocation3], 0
          %s215 = sshll.u32 %s1, 4
          %s216 = int_to_ptr.hbm [resolvable:$true] %s215
          %s217 = sshll.u32 [#allocation2], 4
          %s218 = int_to_ptr.vmem [resolvable:$true] %s217
          %223 = dma.hbm_to_vmem [thread:$0]  %s216, 256, %s218, [#allocation3], 64, 64, 4
        $region16: #{autoencoder_forward.1} parent=11 // pred_fallthru
          _
        // Predicated region
        $region17: #{autoencoder_forward.1} parent=11 // pred_check
          %p224 = pneg %p85
        $region18: #{autoencoder_forward.1} parent=11 // pred_check_branch
          %226 = sbr.rel (%p224) target = $region20
        $region19: #{autoencoder_forward.1} parent=11 // pred_region
          _
        $region20: #{autoencoder_forward.1} parent=11 // pred_fallthru
          _
        // Predicated region
        $region21: #{autoencoder_forward.1} parent=11 // pred_check
          %p227 = pneg %p106
        $region22: #{autoencoder_forward.1} parent=11 // pred_check_branch
          %229 = sbr.rel (%p227) target = $region24
        $region23: #{autoencoder_forward.1} parent=11 // pred_region
          _
        $region24: #{autoencoder_forward.1} parent=11 // pred_fallthru
          _
        // Predicated region
        $region25: #{autoencoder_forward.1} parent=11 // pred_check
          %p230 = pneg %p127
        $region26: #{autoencoder_forward.1} parent=11 // pred_check_branch
          %232 = sbr.rel (%p230) target = $region28
        $region27: #{autoencoder_forward.1} parent=11 // pred_region
          _
        $region28: #{autoencoder_forward.1} parent=11 // pred_fallthru
          _
        // Predicated region
        $region29: #{autoencoder_forward.1} parent=11 // pred_check
          %p233 = pneg %p148
        $region30: #{autoencoder_forward.1} parent=11 // pred_check_branch
          %235 = sbr.rel (%p233) target = $region32
        $region31: #{autoencoder_forward.1} parent=11 // pred_region
          _
        $region32: #{autoencoder_forward.1} parent=11 // pred_fallthru
          _
        // Predicated region
        $region33: #{autoencoder_forward.1} parent=11 // pred_check
          %p236 = pneg %p169
        $region34: #{autoencoder_forward.1} parent=11 // pred_check_branch
          %238 = sbr.rel (%p236) target = $region36
        $region35: #{autoencoder_forward.1} parent=11 // pred_region
          _
        $region36: #{autoencoder_forward.1} parent=11 // pred_fallthru
          _
      $region12: #{autoencoder_forward.1} parent=5 // pred_fallthru
        _
      %p239 = scmp.lt.s32.totalorder %s17, 2
      // Predicated region
      $region37: #{autoencoder_forward.1} parent=5 // pred_check
        %p240 = pneg %p239
      $region38: #{autoencoder_forward.1} parent=5 // pred_check_branch
        %242 = sbr.rel (%p240) target = $region40
      $region39: #{autoencoder_forward.1} parent=5 // pred_region
        // Predicated region
        $region41: #{autoencoder_forward.1} parent=39 // pred_check
          %p243 = pneg %p37
        $region42: #{autoencoder_forward.1} parent=39 // pred_check_branch
          %245 = sbr.rel (%p243) target = $region44
        $region43: #{autoencoder_forward.1} parent=39 // pred_region
          %p246 = scmp.lt.s32.totalorder %s17, 1
          %s247 = scalar_select %p246, %s17, 1
          %s248 = smul.addr %s247, 8
          %s249 = scalar_lea.vmem %s0, %s248
        $region44: #{autoencoder_forward.1} parent=39 // pred_fallthru
          _
      $region40: #{autoencoder_forward.1} parent=5 // pred_fallthru
        _
      %p250 = scmp.le.s32.totalorder 1, %s17
      %p251 = scmp.lt.s32.totalorder %s17, 3
      %p252 = pnand %p250, %p251
      %p253 = pneg %p252
      // Predicated region
      $region45: #{autoencoder_forward.1} parent=5 // pred_check
        _
      $region46: #{autoencoder_forward.1} parent=5 // pred_check_branch
        %255 = sbr.rel (%p252) target = $region48
      $region47: #{autoencoder_forward.1} parent=5 // pred_region
        %s256 = ssub.s32 %s17, 1
        // Predicated region
        $region49: #{autoencoder_forward.1} parent=47 // pred_check
          %p257 = pneg %p64
        $region50: #{autoencoder_forward.1} parent=47 // pred_check_branch
          %259 = sbr.rel (%p257) target = $region52
        $region51: #{autoencoder_forward.1} parent=47 // pred_region
          %261 = dma.done [#allocation3], 256
        $region52: #{autoencoder_forward.1} parent=47 // pred_fallthru
          _
        %p262 = scmp.lt.s32.totalorder %s22, 1
        %s263 = scalar_select %p262, %s22, 1
        %s264 = smul.addr %s263, 8
        %s265 = scalar_lea.vmem %s0, %s264
        %p266 = pneg %p43
        %p267 = pneg %p40
        %p268 = pneg %p64
        %p269 = pneg %p61
        %p270 = pneg %p85
        %p271 = pneg %p82
        %p272 = pneg %p106
        %p273 = pneg %p103
        %p274 = pneg %p127
        %p275 = pneg %p124
        %p276 = pneg %p148
        %p277 = pneg %p145
        %p278 = pneg %p169
        %p279 = pneg %p166
        %p280 = pneg %p195
        %p281 = pneg %p192
        %s282 = sand.u32 %s182, 1
        %s283 = scalar_lea.sflag [#allocation4], %s282
        %s284 = sand.u32 %s182, 1
        %s285 = smul.addr %s284, 8
        %s286 = scalar_lea.vmem [#allocation5], %s285
        %p287 = scmp.lt.s32.totalorder %s22, 1
        %s288 = scalar_select %p287, %s22, 1
        %s289 = smul.addr %s288, 8
        %s290 = scalar_lea.vmem %s0, %s289
        %v292 = vld [vmem:[%s290] sm:$0xff]
        %v293 = vpack.c.bf16 %v292, %v292
        %v294 = vld [vmem:[#allocation2] sm:$0xf]
        %v295 = vld [vmem:[#allocation2 + $0x4] sm:$0xf]
        %v296 = vld [vmem:[#allocation2 + $0x8] sm:$0xf]
        %v297 = vld [vmem:[#allocation2 + $0xc] sm:$0xf]
        %v298 = vld [vmem:[%s2] sm:$0x1]
        %v300 = vperm.slane %v298, 0
        %v306 = vunpack.c.l.b16 %v294
        %v307 = vunpack.c.l.b16 %v295
        %v308 = vunpack.c.l.b16 %v296
        %v309 = vunpack.c.l.b16 %v297
        %v310 = vpack.c.b16 %v307, %v306
        %v311 = vpack.c.b16 %v309, %v308
        %vm314 = vcmask 261120
        %v316 = vsel %vm314, %v293, 0
        %318 = vmatpush.bf16.msra.mxu0 0
        %319 = vmatpush.bf16.msra.mxu0 0
        %320 = vmatpush.bf16.msra.mxu0 0
        %321 = vmatpush.bf16.msra.mxu0 0
        %322 = vmatpush.bf16.msra.mxu0 0
        %323 = vmatpush.bf16.msra.mxu0 0
        %324 = vmatpush.bf16.msra.mxu0 %v311
        %325 = vmatpush.bf16.msra.mxu0 %v310
        %326 = vmatmul.bf16.gmra.mxu0 %v316
        %v327 = vpop.f32.mrf.mxu0
        %v328 = vadd.f32 %v300, %v327
        %v329 = vpop.f32.mrf.mxu0
        %330 = vdwg.mxu0
        %v331 = vmax.f32 %v328, 0.0
        %v332 = vpack.c.bf16 %v331, %v331
        %v333 = vld [vmem:[%s3] sm:$0xf]
        %v334 = vld [vmem:[%s3 + $0x4] sm:$0xf]
        %v335 = vld [vmem:[%s3 + $0x8] sm:$0xf]
        %v336 = vld [vmem:[%s3 + $0xc] sm:$0xf]
        %v337 = vld [vmem:[%s3 + $0x10] sm:$0xf]
        %v338 = vld [vmem:[%s3 + $0x14] sm:$0xf]
        %v339 = vld [vmem:[%s3 + $0x18] sm:$0xf]
        %v340 = vld [vmem:[%s3 + $0x1c] sm:$0xf]
        %v341 = vld [vmem:[%s3 + $0x20] sm:$0xf]
        %v342 = vld [vmem:[%s3 + $0x24] sm:$0xf]
        %v343 = vld [vmem:[%s3 + $0x28] sm:$0xf]
        %v344 = vld [vmem:[%s3 + $0x2c] sm:$0xf]
        %v345 = vld [vmem:[%s3 + $0x30] sm:$0xf]
        %v346 = vld [vmem:[%s3 + $0x34] sm:$0xf]
        %v347 = vld [vmem:[%s3 + $0x38] sm:$0xf]
        %v348 = vld [vmem:[%s3 + $0x3c] sm:$0xf]
        %v349 = vld [vmem:[%s4] sm:$0x1]
        %v351 = vperm.slane %v349, 0
        %v369 = vunpack.c.l.b16 %v333
        %v370 = vunpack.c.l.b16 %v334
        %v371 = vunpack.c.l.b16 %v335
        %v372 = vunpack.c.l.b16 %v336
        %v373 = vunpack.c.l.b16 %v337
        %v374 = vunpack.c.l.b16 %v338
        %v375 = vunpack.c.l.b16 %v339
        %v376 = vunpack.c.l.b16 %v340
        %v377 = vunpack.c.l.b16 %v341
        %v378 = vunpack.c.l.b16 %v342
        %v379 = vunpack.c.l.b16 %v343
        %v380 = vunpack.c.l.b16 %v344
        %v381 = vunpack.c.l.b16 %v345
        %v382 = vunpack.c.l.b16 %v346
        %v383 = vunpack.c.l.b16 %v347
        %v384 = vunpack.c.l.b16 %v348
        %v385 = vpack.c.b16 %v370, %v369
        %v386 = vpack.c.b16 %v372, %v371
        %v387 = vpack.c.b16 %v374, %v373
        %v388 = vpack.c.b16 %v376, %v375
        %v389 = vpack.c.b16 %v378, %v377
        %v390 = vpack.c.b16 %v380, %v379
        %v391 = vpack.c.b16 %v382, %v381
        %v392 = vpack.c.b16 %v384, %v383
        %401 = vmatpush.bf16.msra.mxu0 %v392
        %402 = vmatpush.bf16.msra.mxu0 %v391
        %403 = vmatpush.bf16.msra.mxu0 %v390
        %404 = vmatpush.bf16.msra.mxu0 %v389
        %405 = vmatpush.bf16.msra.mxu0 %v388
        %406 = vmatpush.bf16.msra.mxu0 %v387
        %407 = vmatpush.bf16.msra.mxu0 %v386
        %408 = vmatpush.bf16.msra.mxu0 %v385
        %409 = vmatmul.bf16.gmra.mxu0 %v332
        %v410 = vpop.f32.mrf.mxu0
        %v411 = vadd.f32 %v351, %v410
        %v412 = vpop.f32.mrf.mxu0
        %413 = vdwg.mxu0
        %v414 = vmax.f32 %v411, 0.0
        %v415 = vpack.c.bf16 %v414, %v414
        %v416 = vld [vmem:[%s5] sm:$0xf]
        %v417 = vld [vmem:[%s5 + $0x4] sm:$0xf]
        %v418 = vld [vmem:[%s5 + $0x8] sm:$0xf]
        %v419 = vld [vmem:[%s5 + $0xc] sm:$0xf]
        %v420 = vld [vmem:[%s5 + $0x10] sm:$0xf]
        %v421 = vld [vmem:[%s5 + $0x14] sm:$0xf]
        %v422 = vld [vmem:[%s5 + $0x18] sm:$0xf]
        %v423 = vld [vmem:[%s5 + $0x1c] sm:$0xf]
        %v424 = vld [vmem:[%s5 + $0x20] sm:$0xf]
        %v425 = vld [vmem:[%s5 + $0x24] sm:$0xf]
        %v426 = vld [vmem:[%s5 + $0x28] sm:$0xf]
        %v427 = vld [vmem:[%s5 + $0x2c] sm:$0xf]
        %v428 = vld [vmem:[%s5 + $0x30] sm:$0xf]
        %v429 = vld [vmem:[%s5 + $0x34] sm:$0xf]
        %v430 = vld [vmem:[%s5 + $0x38] sm:$0xf]
        %v431 = vld [vmem:[%s5 + $0x3c] sm:$0xf]
        %v432 = vld [vmem:[%s6] sm:$0x1]
        %v434 = vperm.slane %v432, 0
        %v452 = vunpack.c.l.b16 %v416
        %v453 = vunpack.c.l.b16 %v417
        %v454 = vunpack.c.l.b16 %v418
        %v455 = vunpack.c.l.b16 %v419
        %v456 = vunpack.c.l.b16 %v420
        %v457 = vunpack.c.l.b16 %v421
        %v458 = vunpack.c.l.b16 %v422
        %v459 = vunpack.c.l.b16 %v423
        %v460 = vunpack.c.l.b16 %v424
        %v461 = vunpack.c.l.b16 %v425
        %v462 = vunpack.c.l.b16 %v426
        %v463 = vunpack.c.l.b16 %v427
        %v464 = vunpack.c.l.b16 %v428
        %v465 = vunpack.c.l.b16 %v429
        %v466 = vunpack.c.l.b16 %v430
        %v467 = vunpack.c.l.b16 %v431
        %v468 = vpack.c.b16 %v453, %v452
        %v469 = vpack.c.b16 %v455, %v454
        %v470 = vpack.c.b16 %v457, %v456
        %v471 = vpack.c.b16 %v459, %v458
        %v472 = vpack.c.b16 %v461, %v460
        %v473 = vpack.c.b16 %v463, %v462
        %v474 = vpack.c.b16 %v465, %v464
        %v475 = vpack.c.b16 %v467, %v466
        %484 = vmatpush.bf16.msra.mxu0 %v475
        %485 = vmatpush.bf16.msra.mxu0 %v474
        %486 = vmatpush.bf16.msra.mxu0 %v473
        %487 = vmatpush.bf16.msra.mxu0 %v472
        %488 = vmatpush.bf16.msra.mxu0 %v471
        %489 = vmatpush.bf16.msra.mxu0 %v470
        %490 = vmatpush.bf16.msra.mxu0 %v469
        %491 = vmatpush.bf16.msra.mxu0 %v468
        %492 = vmatmul.bf16.gmra.mxu0 %v415
        %v493 = vpop.f32.mrf.mxu0
        %v494 = vadd.f32 %v434, %v493
        %v495 = vpop.f32.mrf.mxu0
        %496 = vdwg.mxu0
        %497 = vst.msk [vmem:[%s286] sm:$0xff] %vm314, %v494
        %s498 = sand.u32 %s182, 1
        %s499 = scalar_lea.sflag [#allocation4], %s498
        %s500 = sand.u32 %s182, 1
        %s501 = smul.addr %s500, 8
        %s502 = scalar_lea.vmem [#allocation5], %s501
        // Predicated region
        $region53: #{autoencoder_forward.1} parent=47 // pred_check
          %p503 = pneg %p192
        $region54: #{autoencoder_forward.1} parent=47 // pred_check_branch
          %505 = sbr.rel (%p503) target = $region56
        $region55: #{autoencoder_forward.1} parent=47 // pred_region
          %507 = vsyncadd %s499, 0
          %s508 = smul.addr %s22, 8
          %s509 = scalar_lea.hbm %s7, %s508
          %s511 = sshll.u32 %s502, 4
          %s512 = int_to_ptr.vmem [resolvable:$true] %s511
          %s513 = sshll.u32 %s509, 4
          %s514 = int_to_ptr.hbm [resolvable:$true] %s513
          %516 = dma.vmem_to_hbm [thread:$0]  %s512, 128, %s514, %s499
        $region56: #{autoencoder_forward.1} parent=47 // pred_fallthru
          _
      $region48: #{autoencoder_forward.1} parent=5 // pred_fallthru
        _
      %p517 = scmp.le.s32.totalorder 2, %s17
      // Predicated region
      $region57: #{autoencoder_forward.1} parent=5 // pred_check
        %p518 = pneg %p517
      $region58: #{autoencoder_forward.1} parent=5 // pred_check_branch
        %520 = sbr.rel (%p518) target = $region60
      $region59: #{autoencoder_forward.1} parent=5 // pred_region
        %s521 = ssub.s32 %s17, 2
        // Predicated region
        $region61: #{autoencoder_forward.1} parent=59 // pred_check
          %p522 = pneg %p198
        $region62: #{autoencoder_forward.1} parent=59 // pred_check_branch
          %524 = sbr.rel (%p522) target = $region64
        $region63: #{autoencoder_forward.1} parent=59 // pred_region
          %s525 = sand.u32 %s183, 1
          %s526 = scalar_lea.sflag [#allocation4], %s525
          %s527 = sand.u32 %s183, 1
          %s528 = smul.addr %s527, 8
          %s529 = scalar_lea.vmem [#allocation5], %s528
          %531 = dma.done %s526, 128
        $region64: #{autoencoder_forward.1} parent=59 // pred_fallthru
          _
      $region60: #{autoencoder_forward.1} parent=5 // pred_fallthru
        _
    $region6: #{autoencoder_forward.1} parent=1 // loop_footer
      %s21 = sadd.s32 1, %s17
    $region7: #{autoencoder_forward.1} parent=1 // loop_footer_branch
      %16 = sbr.rel target = $region3
    $region8: #{autoencoder_forward.1} parent=1 // loop_exit
      _
    %532 = vsyncpa [#allocation3], 1
    %s533 = scalar_lea.sflag [#allocation3], 1
    %534 = vsyncpa %s533, 1
    %535 = vsyncpa [#allocation4], 1
    %s536 = scalar_lea.sflag [#allocation4], 1
    %537 = vsyncpa %s536, 1

</llo_original>
